<compile_context>
chip_gen: v6e
topology: v6e:2x2x1
jax: 0.10.0
libtpu: 0.0.40
codegen_flags: <defaults>
</compile_context>

<pallas_src>
import functools

import jax
import jax.numpy as jnp
from jax.experimental import pallas as pl
from jax.experimental.pallas import tpu as pltpu


_VMEM_LIMIT_BYTES = 48 << 20   # > v5e 16 MiB scoped default, < v7x 64 MiB physical
_DEFAULT_TILE_BUDGET = 4 << 20  # ~4 MiB x-tile: measured HBM-roofline sweet spot


# --------------------------------------------------------------------------- #
# Kernels
# --------------------------------------------------------------------------- #
def _insnorm_kernel(x_ref, scale_ref, o_ref, *, eps, inv_hw):
    """Single-sweep path: full HW per row tile.

    x_ref: (TR, HW); scale_ref: (TR, 1) — scale doubles as the shift (matches
    the reference forward).  Two-pass variance (numerically robust; the tile is
    already VMEM-resident so the extra pass is free under HBM-bound slack).
    """
    x = x_ref[...].astype(jnp.float32)                          # (TR, HW)
    mean = jnp.sum(x, axis=-1, keepdims=True) * inv_hw          # (TR, 1)
    centered = x - mean
    var = jnp.sum(centered * centered, axis=-1, keepdims=True) * inv_hw
    scale = scale_ref[...].astype(jnp.float32)                  # (TR, 1)
    a = jax.lax.rsqrt(var + eps) * scale                        # EUP rsqrt
    o_ref[...] = (centered * a + scale).astype(o_ref.dtype)


def _stats_kernel(x_ref, scale_ref, coeff_ref, *, eps, inv_hw, hw, tk):
    """HW-chunked path, sweep 1: accumulate sum / sum-of-squares per row.

    Grid (nr, nk); coeff block (TR, 2) is revisited across the (last,
    "arbitrary") k axis.  On the final chunk, converts the running sums into
    the affine coefficients a, b (scale folded in; scale doubles as shift).
    """
    k = pl.program_id(1)

    @pl.when(k == 0)
    def _():
        coeff_ref[...] = jnp.zeros_like(coeff_ref)

    x = x_ref[...].astype(jnp.float32)                          # (TR, TK)
    # Mask the lane-ragged last chunk so padded lanes don't pollute the sums.
    lane = jax.lax.broadcasted_iota(jnp.int32, x.shape, 1)
    x = jnp.where(k * tk + lane < hw, x, 0.0)

    coeff_ref[:, 0:1] += jnp.sum(x, axis=-1, keepdims=True)
    coeff_ref[:, 1:2] += jnp.sum(x * x, axis=-1, keepdims=True)

    @pl.when(k == pl.num_programs(1) - 1)
    def _():
        mean = coeff_ref[:, 0:1] * inv_hw
        # Biased variance via E[x^2] - mean^2 (avoids a third HBM sweep);
        # clamp guards tiny negative round-off.
        var = jnp.maximum(coeff_ref[:, 1:2] * inv_hw - mean * mean, 0.0)
        scale = scale_ref[...].astype(jnp.float32)
        a = jax.lax.rsqrt(var + eps) * scale
        b = scale - mean * a        # scale used as the shift (matches ref)
        coeff_ref[:, 0:1] = a
        coeff_ref[:, 1:2] = b


def _apply_kernel(x_ref, coeff_ref, o_ref):
    """HW-chunked path, sweep 2: out = x * a + b."""
    x = x_ref[...].astype(jnp.float32)
    a = coeff_ref[:, 0:1]
    b = coeff_ref[:, 1:2]
    o_ref[...] = (x * a + b).astype(o_ref.dtype)


# --------------------------------------------------------------------------- #
# Tile selection
# --------------------------------------------------------------------------- #
def _round_up(n, m):
    return ((n + m - 1) // m) * m


def _row_pack(itemsize):
    # Sub-32-bit dtypes pack 2/4 rows per sublane: 8 f32, 16 bf16, 32 int8/fp8.
    return max(8, 32 // max(itemsize, 1))


def _pick_row_tile(rows, hw, itemsize, pack,
                   budget_bytes, min_tile_bytes=512 << 10):
    """Row-tile height for the single-sweep path (cdiv grid; no divisor hunt).

    Ragged last tiles are handled by Pallas' masked writeback.  Prefers >= 4
    grid steps (>= 2 per TensorCore on v7x) when tiles stay >= min_tile_bytes.
    """
    bytes_per_row = max(hw * itemsize, 1)
    cap = max(pack, (budget_bytes // bytes_per_row) // pack * pack)
    target = _round_up(-(-rows // 4), pack)            # ~4 grid steps
    if target * bytes_per_row >= min_tile_bytes:
        cap = min(cap, target)
    if cap >= rows:
        return rows          # single full-extent block: always a legal shape
    return cap


def _pick_hw_chunk(hw, itemsize, pack, budget_bytes):
    """(TR, TK) for the HW-chunked path.

    TK is a lane-dense multiple of 128 chosen so a pack-high tile fills the
    budget (long contiguous DMA segments); TR is the row pack (or more if the
    budget allows).
    """
    tk = max(128, (budget_bytes // (pack * itemsize)) // 128 * 128)
    tk = min(tk, _round_up(hw, 128))
    tr = max(pack, (budget_bytes // (tk * itemsize)) // pack * pack)
    return tr, tk


# --------------------------------------------------------------------------- #
# Wrappers
# --------------------------------------------------------------------------- #
def _insnorm_row_tiled(x_flat, scale_rows, eps, rows, hw, itemsize, pack,
                       budget_bytes):
    tr = _pick_row_tile(rows, hw, itemsize, pack, budget_bytes)
    grid = (pl.cdiv(rows, tr),)
    kernel = functools.partial(_insnorm_kernel, eps=eps, inv_hw=1.0 / hw)
    return pl.pallas_call(
        kernel,
        out_shape=jax.ShapeDtypeStruct((rows, hw), x_flat.dtype),
        grid_spec=pltpu.PrefetchScalarGridSpec(
            num_scalar_prefetch=0,
            grid=grid,
            in_specs=[
                pl.BlockSpec((tr, hw), lambda r: (r, 0)),
                # (TR, 1) per-step scale block; negligible bytes vs x.
                pl.BlockSpec((tr, 1), lambda r: (r, 0)),
            ],
            out_specs=pl.BlockSpec((tr, hw), lambda r: (r, 0)),
        ),
        compiler_params=pltpu.CompilerParams(
            dimension_semantics=("parallel",),
            vmem_limit_bytes=_VMEM_LIMIT_BYTES,
        ),
    )(x_flat, scale_rows)


def _insnorm_hw_chunked(x_flat, scale_rows, eps, rows, hw, itemsize, pack,
                        budget_bytes):
    tr, tk = _pick_hw_chunk(hw, itemsize, pack, budget_bytes)
    nr = pl.cdiv(rows, tr)
    nk = pl.cdiv(hw, tk)

    stats = functools.partial(_stats_kernel, eps=eps, inv_hw=1.0 / hw,
                              hw=hw, tk=tk)
    coeff = pl.pallas_call(
        stats,
        out_shape=jax.ShapeDtypeStruct((rows, 2), jnp.float32),
        grid_spec=pltpu.PrefetchScalarGridSpec(
            num_scalar_prefetch=0,
            grid=(nr, nk),                      # reduction axis (k) last
            in_specs=[
                pl.BlockSpec((tr, tk), lambda r, k: (r, k)),
                pl.BlockSpec((tr, 1), lambda r, k: (r, 0)),
            ],
            out_specs=pl.BlockSpec((tr, 2), lambda r, k: (r, 0)),
        ),
        compiler_params=pltpu.CompilerParams(
            dimension_semantics=("parallel", "arbitrary"),
            vmem_limit_bytes=_VMEM_LIMIT_BYTES,
        ),
    )(x_flat, scale_rows)

    return pl.pallas_call(
        _apply_kernel,
        out_shape=jax.ShapeDtypeStruct((rows, hw), x_flat.dtype),
        grid_spec=pltpu.PrefetchScalarGridSpec(
            num_scalar_prefetch=0,
            grid=(nr, nk),
            in_specs=[
                pl.BlockSpec((tr, tk), lambda r, k: (r, k)),
                pl.BlockSpec((tr, 2), lambda r, k: (r, 0)),
            ],
            out_specs=pl.BlockSpec((tr, tk), lambda r, k: (r, k)),
        ),
        compiler_params=pltpu.CompilerParams(
            dimension_semantics=("parallel", "parallel"),
            vmem_limit_bytes=_VMEM_LIMIT_BYTES,
        ),
    )(x_flat, coeff)


def insnorm(x, scale, shift, eps=1e-9, *,
            x_tile_budget_bytes=_DEFAULT_TILE_BUDGET):
    """x: (B, C, H, W); scale/shift: (C,). Returns (B, C, H, W).

    Matches InsNorm.forward, which uses `scale` in place of `shift`.
    """
    del shift  # intentionally unused — the reference forward adds `scale`
    B, C, H, W = x.shape
    HW = H * W
    rows = B * C

    x_flat = x.reshape(rows, HW)
    # Per-row scale: row r = b*C + c corresponds to channel c.
    scale_rows = jnp.broadcast_to(scale[None, :], (B, C)).reshape(rows, 1)

    itemsize = jnp.dtype(x.dtype).itemsize
    pack = _row_pack(itemsize)

    if HW * pack * itemsize <= x_tile_budget_bytes:
        out_flat = _insnorm_row_tiled(x_flat, scale_rows, float(eps),
                                      rows, HW, itemsize, pack,
                                      x_tile_budget_bytes)
    else:
        # Even a single row-pack of full rows exceeds the budget -> chunk HW.
        out_flat = _insnorm_hw_chunked(x_flat, scale_rows, float(eps),
                                       rows, HW, itemsize, pack,
                                       x_tile_budget_bytes)
    return out_flat.reshape(B, C, H, W)


# --------------------------------------------------------------------------- #
# Reference & test
# --------------------------------------------------------------------------- #
def _reference(x, scale, shift, eps=1e-9):
    # Pure-JAX mirror of the PyTorch forward (including scale-used-as-shift
    # and the unbiased -> biased variance conversion).
    del shift
    B, C, H, W = x.shape
    hw = H * W
    vec = x.reshape(B, C, hw)
    mean = jnp.mean(vec, axis=2)[:, :, None, None]
    var = jnp.var(vec, axis=2, ddof=1)[:, :, None, None] * ((hw - 1) / float(hw))
    s = scale[None, :, None, None]
    return (x - mean) / jnp.sqrt(var + eps) * s + s


if __name__ == "__main__":
    base_key = jax.random.PRNGKey(0)

    def check(idx, shape, budget_bytes):
        kx, ks = jax.random.split(jax.random.fold_in(base_key, idx))
        _, C, _, _ = shape
        x = jax.random.normal(kx, shape, dtype=jnp.float32)
        # Deterministic parameter init mirroring _reset_parameters():
        #   scale ~ U[0, 1), shift = 0 (shift is unused by the forward).
        scale = jax.random.uniform(ks, (C,), dtype=jnp.float32)
        shift = jnp.zeros((C,), dtype=jnp.float32)

        out = jax.block_until_ready(
            insnorm(x, scale, shift, x_tile_budget_bytes=budget_bytes))
        ref = _reference(x, scale, shift)
        assert out.shape == shape
        assert jnp.allclose(out, ref, atol=1e-5, rtol=1e-5), (shape, budget_bytes)

    # Main row-tiled path at the module's nominal small shape.
    check(0, (2, 4, 16, 16), _DEFAULT_TILE_BUDGET)
    # Non-128-multiple HW (14*14 = 196) and rows = 15 (full-extent block).
    check(1, (3, 5, 14, 14), _DEFAULT_TILE_BUDGET)
    # Row-tiled path with a ragged last row tile (tiny budget -> TR=8, rows=15).
    check(2, (3, 5, 14, 14), 8 << 10)
    # Large-HW chunked path (forced by a tiny budget): lane-ragged last chunk
    # plus ragged last row tile.
    check(3, (3, 5, 14, 14), 4 << 10)
    # Large-HW chunked path with evenly dividing chunks.
    check(4, (2, 4, 16, 16), 4 << 10)

    print("KERNEL_OK")
</pallas_src>

<mosaic_0001>
module attributes {stable_mosaic.version = 11 : i64} {
  func.func @_insnorm_kernel(%arg0: i32, %arg1: memref<8x256xf32, #tpu.memory_space<vmem>>, %arg2: memref<8x1xf32, #tpu.memory_space<vmem>>, %arg3: memref<8x256xf32, #tpu.memory_space<vmem>>) attributes {dimension_semantics = [#tpu.dimension_semantics<parallel>], iteration_bounds = array<i64: 1>, scalar_prefetch = 0 : i64, scratch_operands = 0 : i64, tpu.core_type = #tpu.core_type<tc>, window_params = [{transform_indices = @transform_0, window_bounds = array<i64: 8, 256>}, {transform_indices = @transform_1, window_bounds = array<i64: 8, 1>}, {transform_indices = @transform_2, window_bounds = array<i64: 8, 256>}]} {
    %c0 = arith.constant 0 : index
    %c0_0 = arith.constant 0 : index
    %0 = vector.load %arg1[%c0, %c0_0] : memref<8x256xf32, #tpu.memory_space<vmem>>, vector<8x256xf32>
    %cst = arith.constant dense<0.000000e+00> : vector<8xf32>
    %1 = vector.multi_reduction <add>, %0, %cst [1] : vector<8x256xf32> to vector<8xf32>
    %2 = vector.shape_cast %1 : vector<8xf32> to vector<8x1xf32>
    %cst_1 = arith.constant 3.906250e-03 : f32
    %3 = vector.broadcast %cst_1 : f32 to vector<8x1xf32>
    %4 = arith.mulf %2, %3 : vector<8x1xf32>
    %5 = vector.broadcast %4 : vector<8x1xf32> to vector<8x256xf32>
    %6 = arith.subf %0, %5 : vector<8x256xf32>
    %7 = arith.mulf %6, %6 : vector<8x256xf32>
    %cst_2 = arith.constant dense<0.000000e+00> : vector<8xf32>
    %8 = vector.multi_reduction <add>, %7, %cst_2 [1] : vector<8x256xf32> to vector<8xf32>
    %9 = vector.shape_cast %8 : vector<8xf32> to vector<8x1xf32>
    %cst_3 = arith.constant 3.906250e-03 : f32
    %10 = vector.broadcast %cst_3 : f32 to vector<8x1xf32>
    %11 = arith.mulf %9, %10 : vector<8x1xf32>
    %c0_4 = arith.constant 0 : index
    %c0_5 = arith.constant 0 : index
    %12 = vector.load %arg2[%c0_4, %c0_5] : memref<8x1xf32, #tpu.memory_space<vmem>>, vector<8x1xf32>
    %cst_6 = arith.constant 9.99999971E-10 : f32
    %13 = vector.broadcast %cst_6 : f32 to vector<8x1xf32>
    %14 = arith.addf %11, %13 : vector<8x1xf32>
    %15 = math.rsqrt %14 : vector<8x1xf32>
    %16 = arith.mulf %15, %12 : vector<8x1xf32>
    %17 = vector.broadcast %16 : vector<8x1xf32> to vector<8x256xf32>
    %18 = arith.mulf %6, %17 : vector<8x256xf32>
    %19 = vector.broadcast %12 : vector<8x1xf32> to vector<8x256xf32>
    %20 = arith.addf %18, %19 : vector<8x256xf32>
    %c0_7 = arith.constant 0 : index
    %c0_8 = arith.constant 0 : index
    %21 = vector.load %arg3[%c0_7, %c0_8] : memref<8x256xf32, #tpu.memory_space<vmem>>, vector<8x256xf32>
    tpu.vector_store %arg3[%c0_7, %c0_8], %20 {strides = array<i32>} : memref<8x256xf32, #tpu.memory_space<vmem>>, vector<8x256xf32>,
    return
  }
  func.func @transform_0(%arg0: i32) -> (i32, i32) {
    %c0_i32 = arith.constant 0 : i32
    %c0_i32_0 = arith.constant 0 : i32
    return %arg0, %c0_i32 : i32, i32
  }
  func.func @transform_1(%arg0: i32) -> (i32, i32) {
    %c0_i32 = arith.constant 0 : i32
    %c0_i32_0 = arith.constant 0 : i32
    return %arg0, %c0_i32 : i32, i32
  }
  func.func @transform_2(%arg0: i32) -> (i32, i32) {
    %c0_i32 = arith.constant 0 : i32
    %c0_i32_0 = arith.constant 0 : i32
    return %arg0, %c0_i32 : i32, i32
  }
}

</mosaic_0001>

<llo_original>
// kernel: tpu_custom_call.1
$region0: #{tpu_custom_call.1}
  #allocation0 [shape = 'u32[]', space=smem, size = 0x4, offset = 0x4, fixed_abs, tag = 'smem constant byte address 0x4 - core index']
  #allocation1 [shape = 'u32[144,128]{1,0:T(1,128)}', space=vmem, size = 0x12000, scoped, tag = 'internal scratch']
  %s0 = inlined_call_operand.hbm [shape: f32[8,256], index: 0, kind: input, shape index: {}]
  %s1 = inlined_call_operand.vmem [shape: f32[8,1], index: 1, kind: input, shape index: {}]
  %s2 = inlined_call_operand.hbm [shape: f32[8,256], index: 2, kind: output, shape index: {}]
  %s3 = sld [smem:[#allocation0]]
  $region22: #{tpu_custom_call.1} parent=0
    _
  %s5 = ssub.s32 1, %s3
  %s6 = scalar_select 0, %s5, %s3
  $region1: #{tpu_custom_call.1} parent=0
    #allocation2 [shape = 'u8[8192]{0}', space=vmem, size = 0x2000, scoped, tag = 'input window, operand 0, single buffered']
    #allocation3 [shape = 's32[1]{0}', space=sflag, size = 0x4, scoped, tag = 'scoped memory for tpu_custom_call.1']
    #allocation4 [shape = 's32[1]{0}', space=sflag, size = 0x4, scoped, tag = 'scoped memory for tpu_custom_call.1']
    #allocation5 [shape = 'u8[8192]{0}', space=vmem, size = 0x2000, scoped, tag = 'output window, operand 0, single buffered']
    %7 = vsyncpa [#allocation3], 0
    %8 = vsyncpa [#allocation4], 0
    // Predicated region
    $region2: #{tpu_custom_call.1} parent=1 // pred_check
      _
    $region3: #{tpu_custom_call.1} parent=1 // pred_check_branch
      %10 = sbr.rel (0) target = $region5
    $region4: #{tpu_custom_call.1} parent=1 // pred_region
      %s12 = ssub.s32 256, 256
      %13 = vsyncadd [#allocation3], %s12
      %s15 = sshll.u32 [#allocation2], 4
      %s16 = int_to_ptr.vmem [resolvable:$true] %s15
      %18 = dma.hbm_to_vmem [thread:$0]  %s0, 256, %s16, [#allocation3]
    $region5: #{tpu_custom_call.1} parent=1 // pred_fallthru
      _
    // Predicated region
    $region6: #{tpu_custom_call.1} parent=1 // pred_check
      _
    $region7: #{tpu_custom_call.1} parent=1 // pred_check_branch
      %20 = sbr.rel (0) target = $region9
    $region8: #{tpu_custom_call.1} parent=1 // pred_region
      _
    $region9: #{tpu_custom_call.1} parent=1 // pred_fallthru
      _
    // Predicated region
    $region10: #{tpu_custom_call.1} parent=1 // pred_check
      _
    $region11: #{tpu_custom_call.1} parent=1 // pred_check_branch
      %22 = sbr.rel (0) target = $region13
    $region12: #{tpu_custom_call.1} parent=1 // pred_region
      %23 = dma.done [#allocation3], 256
    $region13: #{tpu_custom_call.1} parent=1 // pred_fallthru
      _
    %v24 = vld [vmem:[#allocation2] sm:$0xff]
    %v25 = vld [vmem:[#allocation2 + $0x8] sm:$0xff]
    %v26 = vadd.f32 %v24, %v25
    %27 = vadd.xlane.f32.xlu0 %v26
    %v28 = vpop.xlane.xlu0 %27
    %v29 = vmul.f32 %v28, 0.00390625
    %v30 = vsub.f32 %v24, %v29
    %v31 = vsub.f32 %v25, %v29
    %v32 = vmul.f32 %v30, %v30
    %v33 = vmul.f32 %v31, %v31
    %v34 = vadd.f32 %v32, %v33
    %35 = vadd.xlane.f32.xlu0 %v34
    %v36 = vpop.xlane.xlu0 %35
    %v37 = vmul.f32 %v36, 0.00390625
    %v38 = vld [vmem:[%s1] sm:$0xff]
    %v39 = vadd.f32 %v37, 1e-09
    %v40 = vrsqrt.pop %v39
    %v41 = vmul.f32 %v40, %v38
    %43 = vset.pattern.permute.xlu0 0
    %44 = vperm.xlu0 %43, %v41
    %v45 = vpop.permute.xlu0 %44
    %v47 = vmul.f32 %v30, %v45
    %v48 = vmul.f32 %v31, %v45
    %50 = vset.pattern.permute.xlu0 0
    %51 = vperm.xlu0 %50, %v38
    %v52 = vpop.permute.xlu0 %51
    %v54 = vadd.f32 %v47, %v52
    %v55 = vadd.f32 %v48, %v52
    %56 = vst [vmem:[#allocation5] sm:$0xff] %v54
    %57 = vst [vmem:[#allocation5 + $0x8] sm:$0xff] %v55
    // Predicated region
    $region14: #{tpu_custom_call.1} parent=1 // pred_check
      _
    $region15: #{tpu_custom_call.1} parent=1 // pred_check_branch
      %59 = sbr.rel (0) target = $region17
    $region16: #{tpu_custom_call.1} parent=1 // pred_region
      %s61 = ssub.s32 256, 256
      %62 = vsyncadd [#allocation4], %s61
      %s64 = sshll.u32 [#allocation5], 4
      %s65 = int_to_ptr.vmem [resolvable:$true] %s64
      %67 = dma.vmem_to_hbm [thread:$0]  %s65, 256, %s2, [#allocation4]
    $region17: #{tpu_custom_call.1} parent=1 // pred_fallthru
      _
    // Predicated region
    $region18: #{tpu_custom_call.1} parent=1 // pred_check
      _
    $region19: #{tpu_custom_call.1} parent=1 // pred_check_branch
      %69 = sbr.rel (0) target = $region21
    $region20: #{tpu_custom_call.1} parent=1 // pred_region
      %70 = dma.done [#allocation4], 256
    $region21: #{tpu_custom_call.1} parent=1 // pred_fallthru
      _
    %71 = vsyncpa [#allocation3], 1
    %72 = vsyncpa [#allocation4], 1

</llo_original>
